<compile_context>
chip_gen: v7x
topology: tpu7x:2x2x1
jax: 0.10.0
libtpu: 0.0.40
codegen_flags: <defaults>
</compile_context>

<pallas_src>
import functools
import math

import jax
import jax.numpy as jnp
from jax import lax
from jax.experimental import pallas as pl
from jax.experimental.pallas import tpu as pltpu


# ---------------------------------------------------------------------------
# tile-size helpers (explicit VMEM budgets -> safe on v7x's 64 MiB as well)
# ---------------------------------------------------------------------------
def _pick_row_tile(m, k, nout, cap=512, vmem_budget=16 << 20):
    """Row tile for an (M,K)@(K,N) matmul: a multiple-of-8 divisor of M (no
    padding, no masked tail), sized so double-buffered in/out tiles fit the
    VMEM budget."""
    bytes_per_row = (k + nout) * 4 * 2          # f32, double-buffered in + out
    cap = min(cap, max(8, vmem_budget // bytes_per_row))
    for d in range(min(cap, m), 7, -1):
        if m % d == 0 and d % 8 == 0:
            return d
    return m    # tiny / odd M: one full block (always a legal block shape)


def _pick_conv_rows(h, wp, cin, cap=8, vmem_budget=4 << 20):
    """Output rows per grid step for the stride-1 3x3 conv: a divisor of H whose
    haloed input slab (rows+2, W+2, Cin) fits the scratch budget."""
    for d in range(min(cap, h), 0, -1):
        if h % d == 0 and (d + 2) * wp * cin * 4 <= vmem_budget:
            return d
    return 1


def _pick_merge_rows(hc, w, cin, f, cap=4, vmem_budget=8 << 20):
    """Coarse rows per grid step for the fused 1x1-conv + upsample-add kernel."""
    for d in range(min(cap, hc), 0, -1):
        if hc % d == 0 and 2 * d * w * (cin + 2 * f) * 4 * 2 <= vmem_budget:
            return d
    return 1


# ---------------------------------------------------------------------------
# Kernel 1: row-tiled matmul + bias (1x1 convs, im2col stride-2 convs)
# ---------------------------------------------------------------------------
def _matmul_bias_kernel(x_ref, w_ref, b_ref, o_ref, *, input_relu):
    x = x_ref[...]
    if input_relu:                     # fused ReLU on the input rows (P7)
        x = jnp.maximum(x, 0.0)
    acc = jnp.dot(x, w_ref[...], preferred_element_type=jnp.float32)
    acc = acc + b_ref[...]
    o_ref[...] = acc.astype(o_ref.dtype)


def _pallas_matmul_bias(x2d, w, b, *, input_relu=False):
    m, k = x2d.shape
    kw_, n = w.shape
    assert kw_ == k
    tm = _pick_row_tile(m, k, n)
    return pl.pallas_call(
        functools.partial(_matmul_bias_kernel, input_relu=input_relu),
        out_shape=jax.ShapeDtypeStruct((m, n), x2d.dtype),
        grid=(m // tm,),
        in_specs=[
            pl.BlockSpec((tm, k), lambda i: (i, 0)),
            pl.BlockSpec((k, n), lambda i: (0, 0)),   # weights resident
            pl.BlockSpec((1, n), lambda i: (0, 0)),   # bias resident
        ],
        out_specs=pl.BlockSpec((tm, n), lambda i: (i, 0)),
        compiler_params=pltpu.CompilerParams(
            dimension_semantics=("parallel",)),
    )(x2d, w, b.reshape(1, n))


def conv1x1(x, w, b):
    n, h, ww, c = x.shape
    out = _pallas_matmul_bias(x.reshape(n * h * ww, c), w, b)
    return out.reshape(n, h, ww, -1)


# ---------------------------------------------------------------------------
# Kernel 2: fused 1x1 conv + bias + 2x-nearest-upsampled lateral add
# ---------------------------------------------------------------------------
def _conv1x1_merge_kernel(x_ref, s_ref, w_ref, b_ref, o_ref, *, trc):
    w = w_ref[...]
    b = b_ref[...]
    for j in range(trc):                       # static unroll over coarse rows
        add = b + s_ref[0, j]                  # (W, F): bias + upsampled skip row
        for r in range(2):                     # two fine rows share one coarse row
            x = x_ref[0, 2 * j + r]            # (W, Cin)
            acc = jnp.dot(x, w, preferred_element_type=jnp.float32) + add
            o_ref[0, 2 * j + r] = acc.astype(o_ref.dtype)


def conv1x1_merge(x_fine, coarse, w, b):
    """out = conv1x1(x_fine) + bias + nearest_upsample2x(coarse), single kernel."""
    n, h, wd, cin = x_fine.shape
    nc, hc, wc, f = coarse.shape
    assert (n, h, wd) == (nc, 2 * hc, 2 * wc) and f == w.shape[1]
    # W-direction nearest repeat stays in JAX (half the bytes of a full 2x2
    # upsample); the H-direction repeat is free on-chip via the block layout.
    skip_w = jnp.repeat(coarse, 2, axis=2)          # (N, Hc, W, F)
    trc = _pick_merge_rows(hc, wd, cin, f)
    return pl.pallas_call(
        functools.partial(_conv1x1_merge_kernel, trc=trc),
        out_shape=jax.ShapeDtypeStruct((n, h, wd, f), x_fine.dtype),
        grid=(n, hc // trc),
        in_specs=[
            pl.BlockSpec((1, 2 * trc, wd, cin), lambda i, t: (i, t, 0, 0)),
            pl.BlockSpec((1, trc, wd, f), lambda i, t: (i, t, 0, 0)),
            pl.BlockSpec((cin, f), lambda i, t: (0, 0)),
            pl.BlockSpec((1, f), lambda i, t: (0, 0)),
        ],
        out_specs=pl.BlockSpec((1, 2 * trc, wd, f), lambda i, t: (i, t, 0, 0)),
        compiler_params=pltpu.CompilerParams(
            dimension_semantics=("parallel", "parallel")),
    )(x_fine, skip_w, w, b.reshape(1, f))


# ---------------------------------------------------------------------------
# Kernel 3: 3x3 stride-1 conv with in-kernel taps (halo slab DMA'd from HBM)
# ---------------------------------------------------------------------------
def _conv3x3_s1_kernel(x_hbm, w_ref, b_ref, o_ref, xbuf, sem, *, tro, wo):
    n = pl.program_id(0)
    j = pl.program_id(1)
    row0 = j * tro                              # top padded row of the halo slab
    cp = pltpu.make_async_copy(
        x_hbm.at[n, pl.ds(row0, tro + 2)], xbuf, sem)
    cp.start()
    b = b_ref[...]                              # (1, F)
    f = b.shape[-1]
    cp.wait()
    for r in range(tro):                        # static unroll over output rows
        acc = jnp.zeros((wo, f), jnp.float32)
        for dy in range(3):
            for dx in range(3):
                xt = xbuf[r + dy, pl.ds(dx, wo), :]          # (W, Cin) tap
                acc = acc + jnp.dot(xt, w_ref[dy, dx],
                                    preferred_element_type=jnp.float32)
        o_ref[0, r] = (acc + b).astype(o_ref.dtype)


def conv3x3_s1(x, w, b):
    """3x3, stride 1, padding 1.  No im2col: 9 in-kernel taps on a haloed slab."""
    n, h, wd, cin = x.shape
    f = w.shape[-1]
    xp = jnp.pad(x, ((0, 0), (1, 1), (1, 1), (0, 0)))     # (N, H+2, W+2, Cin)
    wp = wd + 2
    tro = _pick_conv_rows(h, wp, cin)
    return pl.pallas_call(
        functools.partial(_conv3x3_s1_kernel, tro=tro, wo=wd),
        out_shape=jax.ShapeDtypeStruct((n, h, wd, f), x.dtype),
        grid=(n, h // tro),
        in_specs=[
            pl.BlockSpec(memory_space=pl.ANY),                    # stays in HBM
            pl.BlockSpec((3, 3, cin, f), lambda i, j: (0, 0, 0, 0)),
            pl.BlockSpec((1, f), lambda i, j: (0, 0)),
        ],
        out_specs=pl.BlockSpec((1, tro, wd, f), lambda i, j: (i, j, 0, 0)),
        scratch_shapes=[
            pltpu.VMEM((tro + 2, wp, cin), x.dtype),              # halo slab
            pltpu.SemaphoreType.DMA,
        ],
        compiler_params=pltpu.CompilerParams(
            dimension_semantics=("parallel", "parallel")),
    )(xp, w, b.reshape(1, f))


# ---------------------------------------------------------------------------
# stride-2 3x3 convs (P6 / P7): coarsest level only -> keep im2col + matmul
# ---------------------------------------------------------------------------
def _extract_patches_3x3_s2(x):
    n, h, w, c = x.shape
    xp = jnp.pad(x, ((0, 0), (1, 1), (1, 1), (0, 0)))
    ho = (h - 1) // 2 + 1
    wo = (w - 1) // 2 + 1
    taps = []
    for dy in range(3):
        for dx in range(3):
            taps.append(xp[:, dy:dy + 2 * ho:2, dx:dx + 2 * wo:2, :])
    patches = jnp.concatenate(taps, axis=-1)              # (N, Ho, Wo, 9*C)
    return patches.reshape(n * ho * wo, 9 * c), (n, ho, wo)


def conv3x3_s2(x, w, b, *, input_relu=False):
    cin, f = w.shape[-2], w.shape[-1]
    patches, (n, ho, wo) = _extract_patches_3x3_s2(x)
    out = _pallas_matmul_bias(patches, w.reshape(9 * cin, f), b,
                              input_relu=input_relu)
    return out.reshape(n, ho, wo, f)


# ---------------------------------------------------------------------------
# FPN parameters (PyTorch-default-style uniform init)
# ---------------------------------------------------------------------------
def init_fpn_params(key, c3, c4, c5, feat):
    def conv_params(k, kh, kw, cin, cout):
        k1, k2 = jax.random.split(k)
        fan_in = kh * kw * cin
        bound = 1.0 / math.sqrt(fan_in)
        shape = (cin, cout) if kh == 1 else (kh, kw, cin, cout)   # HWIO
        wgt = jax.random.uniform(k1, shape, jnp.float32, -bound, bound)
        bb = jax.random.uniform(k2, (cout,), jnp.float32, -bound, bound)
        return wgt, bb

    keys = jax.random.split(key, 8)
    return {
        "P5_1": conv_params(keys[0], 1, 1, c5, feat),
        "P5_2": conv_params(keys[1], 3, 3, feat, feat),
        "P4_1": conv_params(keys[2], 1, 1, c4, feat),
        "P4_2": conv_params(keys[3], 3, 3, feat, feat),
        "P3_1": conv_params(keys[4], 1, 1, c3, feat),
        "P3_2": conv_params(keys[5], 3, 3, feat, feat),
        "P6":   conv_params(keys[6], 3, 3, c5, feat),
        "P7_2": conv_params(keys[7], 3, 3, feat, feat),
    }


def fpn_forward(params, C3, C4, C5):
    # P5 lateral + output conv
    P5_lat = conv1x1(C5, *params["P5_1"])
    P5_x = conv3x3_s1(P5_lat, *params["P5_2"])

    # P4: fused 1x1(C4) + bias + 2x-upsampled P5 lateral
    P4_merged = conv1x1_merge(C4, P5_lat, *params["P4_1"])
    P4_x = conv3x3_s1(P4_merged, *params["P4_2"])

    # P3: fused 1x1(C3) + bias + 2x-upsampled merged P4
    P3_merged = conv1x1_merge(C3, P4_merged, *params["P3_1"])
    P3_x = conv3x3_s1(P3_merged, *params["P3_2"])

    # P6 / P7 (stride-2 convs on the coarsest level); P7's ReLU fused in-kernel
    P6_x = conv3x3_s2(C5, *params["P6"])
    P7_x = conv3x3_s2(P6_x, *params["P7_2"], input_relu=True)

    return [P3_x, P4_x, P5_x, P6_x, P7_x]


# ---------------------------------------------------------------------------
# Pure-JAX reference (correctness checking only)
# ---------------------------------------------------------------------------
def _ref_conv(x, w, b, stride, pad):
    if w.ndim == 2:
        w = w.reshape(1, 1, *w.shape)
    out = lax.conv_general_dilated(
        x, w, (stride, stride), [(pad, pad), (pad, pad)],
        dimension_numbers=("NHWC", "HWIO", "NHWC"),
        precision=lax.Precision.HIGHEST)
    return out + b


def _upsample2x_ref(x):
    return jnp.repeat(jnp.repeat(x, 2, axis=1), 2, axis=2)


def fpn_forward_ref(params, C3, C4, C5):
    P5_x = _ref_conv(C5, *params["P5_1"], 1, 0)
    P5_up = _upsample2x_ref(P5_x)
    P5_x = _ref_conv(P5_x, *params["P5_2"], 1, 1)

    P4_x = _ref_conv(C4, *params["P4_1"], 1, 0)
    P4_x = P5_up + P4_x
    P4_up = _upsample2x_ref(P4_x)
    P4_x = _ref_conv(P4_x, *params["P4_2"], 1, 1)

    P3_x = _ref_conv(C3, *params["P3_1"], 1, 0)
    P3_x = P3_x + P4_up
    P3_x = _ref_conv(P3_x, *params["P3_2"], 1, 1)

    P6_x = _ref_conv(C5, *params["P6"], 2, 1)
    P7_x = _ref_conv(jnp.maximum(P6_x, 0.0), *params["P7_2"], 2, 1)
    return [P3_x, P4_x, P5_x, P6_x, P7_x]


# ---------------------------------------------------------------------------
if __name__ == "__main__":
    key = jax.random.PRNGKey(0)
    k_c3, k_c4, k_c5, k_p = jax.random.split(key, 4)

    N = 2
    C3_size, C4_size, C5_size, feat = 4, 8, 16, 32
    # FPN spatial pyramid: C3 is 2x C4 which is 2x C5
    C3 = jax.random.normal(k_c3, (N, 16, 16, C3_size), jnp.float32)
    C4 = jax.random.normal(k_c4, (N, 8, 8, C4_size), jnp.float32)
    C5 = jax.random.normal(k_c5, (N, 4, 4, C5_size), jnp.float32)

    params = init_fpn_params(k_p, C3_size, C4_size, C5_size, feat)

    outs = fpn_forward(params, C3, C4, C5)
    outs = [jax.block_until_ready(o) for o in outs]

    # sanity: shapes
    expected = [(N, 16, 16, feat), (N, 8, 8, feat), (N, 4, 4, feat),
                (N, 2, 2, feat), (N, 1, 1, feat)]
    for o, s in zip(outs, expected):
        assert o.shape == s, (o.shape, s)

    # correctness vs pure-JAX reference
    refs = fpn_forward_ref(params, C3, C4, C5)
    for name, o, r in zip(["P3", "P4", "P5", "P6", "P7"], outs, refs):
        err = float(jnp.max(jnp.abs(o - r)))
        assert err < 5e-3, (name, err)

    print("KERNEL_OK")
</pallas_src>

<mosaic_0001>
module attributes {stable_mosaic.version = 11 : i64} {
  func.func @_matmul_bias_kernel(%arg0: i32, %arg1: memref<32x16xf32, #tpu.memory_space<vmem>>, %arg2: memref<16x32xf32, #tpu.memory_space<vmem>>, %arg3: memref<1x32xf32, #tpu.memory_space<vmem>>, %arg4: memref<32x32xf32, #tpu.memory_space<vmem>>) attributes {dimension_semantics = [#tpu.dimension_semantics<parallel>], iteration_bounds = array<i64: 1>, scalar_prefetch = 0 : i64, scratch_operands = 0 : i64, tpu.core_type = #tpu.core_type<tc>, window_params = [{transform_indices = @transform_0, window_bounds = array<i64: 32, 16>}, {pipeline_mode = #tpu.pipeline_mode<synchronous>, transform_indices = @transform_1, window_bounds = array<i64: 16, 32>}, {pipeline_mode = #tpu.pipeline_mode<synchronous>, transform_indices = @transform_2, window_bounds = array<i64: 1, 32>}, {transform_indices = @transform_3, window_bounds = array<i64: 32, 32>}]} {
    %c0 = arith.constant 0 : index
    %c0_0 = arith.constant 0 : index
    %0 = vector.load %arg1[%c0, %c0_0] : memref<32x16xf32, #tpu.memory_space<vmem>>, vector<32x16xf32>
    %c0_1 = arith.constant 0 : index
    %c0_2 = arith.constant 0 : index
    %1 = vector.load %arg2[%c0_1, %c0_2] : memref<16x32xf32, #tpu.memory_space<vmem>>, vector<16x32xf32>
    %cst = arith.constant dense<0.000000e+00> : vector<32x32xf32>
    %2 = tpu.matmul %0, %1, %cst {dimension_numbers = #tpu.dot_dimension_numbers<[1], [0], [0], [1], [0, 0, 1, 1], [], []>} : vector<32x16xf32>, vector<16x32xf32>, vector<32x32xf32> -> vector<32x32xf32>
    %c0_3 = arith.constant 0 : index
    %c0_4 = arith.constant 0 : index
    %3 = vector.load %arg3[%c0_3, %c0_4] : memref<1x32xf32, #tpu.memory_space<vmem>>, vector<1x32xf32>
    %4 = vector.broadcast %3 : vector<1x32xf32> to vector<32x32xf32>
    %5 = arith.addf %2, %4 : vector<32x32xf32>
    %c0_5 = arith.constant 0 : index
    %c0_6 = arith.constant 0 : index
    %6 = vector.load %arg4[%c0_5, %c0_6] : memref<32x32xf32, #tpu.memory_space<vmem>>, vector<32x32xf32>
    tpu.vector_store %arg4[%c0_5, %c0_6], %5 {strides = array<i32>} : memref<32x32xf32, #tpu.memory_space<vmem>>, vector<32x32xf32>,
    return
  }
  func.func @transform_0(%arg0: i32) -> (i32, i32) {
    %c0_i32 = arith.constant 0 : i32
    %c0_i32_0 = arith.constant 0 : i32
    return %arg0, %c0_i32 : i32, i32
  }
  func.func @transform_1(%arg0: i32) -> (i32, i32) {
    %c0_i32 = arith.constant 0 : i32
    %c0_i32_0 = arith.constant 0 : i32
    %c0_i32_1 = arith.constant 0 : i32
    return %c0_i32, %c0_i32_0 : i32, i32
  }
  func.func @transform_2(%arg0: i32) -> (i32, i32) {
    %c0_i32 = arith.constant 0 : i32
    %c0_i32_0 = arith.constant 0 : i32
    %c0_i32_1 = arith.constant 0 : i32
    return %c0_i32, %c0_i32_0 : i32, i32
  }
  func.func @transform_3(%arg0: i32) -> (i32, i32) {
    %c0_i32 = arith.constant 0 : i32
    %c0_i32_0 = arith.constant 0 : i32
    return %arg0, %c0_i32 : i32, i32
  }
}

</mosaic_0001>

<llo_original>
// kernel: tpu_custom_call.1
$region0: #{tpu_custom_call.1}
  #allocation0 [shape = 'u32[]', space=smem, size = 0x4, offset = 0x4, fixed_abs, tag = 'smem constant byte address 0x4 - core index']
  #allocation1 [shape = 'u32[144,128]{1,0:T(1,128)}', space=vmem, size = 0x12000, scoped, tag = 'internal scratch']
  %s0 = inlined_call_operand.vmem [shape: f32[32,16], index: 0, kind: input, shape index: {}]
  %s1 = inlined_call_operand.vmem [shape: f32[16,32], index: 1, kind: input, shape index: {}]
  %s2 = inlined_call_operand.vmem [shape: f32[1,32], index: 2, kind: input, shape index: {}]
  %s3 = inlined_call_operand.hbm [shape: f32[32,32], index: 3, kind: output, shape index: {}]
  %s4 = sld [smem:[#allocation0]]
  $region22: #{tpu_custom_call.1} parent=0
    _
  %s6 = ssub.s32 1, %s4
  %s7 = scalar_select 0, %s6, %s4
  $region1: #{tpu_custom_call.1} parent=0
    #allocation2 [shape = 'u8[16384]{0}', space=vmem, size = 0x4000, scoped, tag = 'output window, operand 0, single buffered']
    #allocation3 [shape = 's32[1]{0}', space=sflag, size = 0x4, scoped, tag = 'scoped memory for tpu_custom_call.1']
    %8 = vsyncpa [#allocation3], 0
    // Predicated region
    $region2: #{tpu_custom_call.1} parent=1 // pred_check
      _
    $region3: #{tpu_custom_call.1} parent=1 // pred_check_branch
      %10 = sbr.rel (0) target = $region5
    $region4: #{tpu_custom_call.1} parent=1 // pred_region
      _
    $region5: #{tpu_custom_call.1} parent=1 // pred_fallthru
      _
    // Predicated region
    $region6: #{tpu_custom_call.1} parent=1 // pred_check
      _
    $region7: #{tpu_custom_call.1} parent=1 // pred_check_branch
      %12 = sbr.rel (0) target = $region9
    $region8: #{tpu_custom_call.1} parent=1 // pred_region
      _
    $region9: #{tpu_custom_call.1} parent=1 // pred_fallthru
      _
    // Predicated region
    $region10: #{tpu_custom_call.1} parent=1 // pred_check
      _
    $region11: #{tpu_custom_call.1} parent=1 // pred_check_branch
      %14 = sbr.rel (0) target = $region13
    $region12: #{tpu_custom_call.1} parent=1 // pred_region
      _
    $region13: #{tpu_custom_call.1} parent=1 // pred_fallthru
      _
    %v15 = vld [vmem:[%s0] sm:$0xff]
    %v16 = vld [vmem:[%s0 + $0x8] sm:$0xff]
    %v17 = vld [vmem:[%s0 + $0x10] sm:$0xff]
    %v18 = vld [vmem:[%s0 + $0x18] sm:$0xff]
    %v19 = vld [vmem:[%s1] sm:$0xff]
    %v20 = vld [vmem:[%s1 + $0x8] sm:$0xff]
    %v21 = vld [vmem:[%s2] sm:$0x1]
    %v23 = vlaneseq
    %v24 = vshrl.u32 %v23, 7
    %v25 = vsub.s32 0, %v24
    %v26 = vrot.slane %v21, %v25
    %vm28 = vcmask 130048
    %v30 = vsel %vm28, %v15, 0
    %v33 = vsel %vm28, %v16, 0
    %v36 = vsel %vm28, %v17, 0
    %v39 = vsel %vm28, %v18, 0
    %41 = vmatprep.subr.mxu0 0.0
    %42 = vmatpush1.msra.mxu0 %v19
    %43 = vmatprep.subr.mxu0 0.0
    %44 = vmatpush1.msra.mxu0 %v20
    %45 = vmatprep.subr.mxu0 0.0
    %46 = vmatpush1.msra.mxu0 0.0
    %47 = vmatprep.subr.mxu0 0.0
    %48 = vmatpush1.msra.mxu0 0.0
    %49 = vmatprep.subr.mxu0 0.0
    %50 = vmatpush1.msra.mxu0 0.0
    %51 = vmatprep.subr.mxu0 0.0
    %52 = vmatpush1.msra.mxu0 0.0
    %53 = vmatprep.subr.mxu0 0.0
    %54 = vmatpush1.msra.mxu0 0.0
    %55 = vmatprep.subr.mxu0 0.0
    %56 = vmatpush1.msra.mxu0 0.0
    %57 = vmatprep.subr.mxu0 0.0
    %58 = vmatpush1.msra.mxu0 0.0
    %59 = vmatprep.subr.mxu0 0.0
    %60 = vmatpush1.msra.mxu0 0.0
    %61 = vmatprep.subr.mxu0 0.0
    %62 = vmatpush1.msra.mxu0 0.0
    %63 = vmatprep.subr.mxu0 0.0
    %64 = vmatpush1.msra.mxu0 0.0
    %65 = vmatprep.subr.mxu0 0.0
    %66 = vmatpush1.msra.mxu0 0.0
    %67 = vmatprep.subr.mxu0 0.0
    %68 = vmatpush1.msra.mxu0 0.0
    %69 = vmatprep.subr.mxu0 0.0
    %70 = vmatpush1.msra.mxu0 0.0
    %71 = vmatprep.subr.mxu0 0.0
    %72 = vmatpush1.msra.mxu0 0.0
    %73 = vmatprep.subr.mxu0 0.0
    %74 = vmatpush1.msra.mxu0 0.0
    %75 = vmatprep.subr.mxu0 0.0
    %76 = vmatpush1.msra.mxu0 0.0
    %77 = vmatprep.subr.mxu0 0.0
    %78 = vmatpush1.msra.mxu0 0.0
    %79 = vmatprep.subr.mxu0 0.0
    %80 = vmatpush1.msra.mxu0 0.0
    %81 = vmatprep.subr.mxu0 0.0
    %82 = vmatpush1.msra.mxu0 0.0
    %83 = vmatprep.subr.mxu0 0.0
    %84 = vmatpush1.msra.mxu0 0.0
    %85 = vmatprep.subr.mxu0 0.0
    %86 = vmatpush1.msra.mxu0 0.0
    %87 = vmatprep.subr.mxu0 0.0
    %88 = vmatpush1.msra.mxu0 0.0
    %89 = vmatprep.subr.mxu0 0.0
    %90 = vmatpush1.msra.mxu0 0.0
    %91 = vmatprep.subr.mxu0 0.0
    %92 = vmatpush1.msra.mxu0 0.0
    %93 = vmatprep.subr.mxu0 0.0
    %94 = vmatpush1.msra.mxu0 0.0
    %95 = vmatprep.subr.mxu0 0.0
    %96 = vmatpush1.msra.mxu0 0.0
    %97 = vmatprep.subr.mxu0 0.0
    %98 = vmatpush1.msra.mxu0 0.0
    %99 = vmatprep.subr.mxu0 0.0
    %100 = vmatpush1.msra.mxu0 0.0
    %101 = vmatprep.subr.mxu0 0.0
    %102 = vmatpush1.msra.mxu0 0.0
    %103 = vmatprep.subr.mxu0 0.0
    %104 = vmatpush1.msra.mxu0 0.0
    %105 = vmatprep.mubr.f32.mxu0 0.0
    %106 = vmatmul.mubr.f32.gmra.mrb[0].mxu0 %v30
    %v107 = vpop.f32.mrb[0].mxu0
    %v108 = vadd.f32 %v26, %v107
    %v109 = vpop.f32.mrb[0].mxu0
    %110 = vmatprep.mubr.f32.mxu0 0.0
    %111 = vmatmul.mubr.f32.gmra.mrb[0].mxu0 %v33
    %v112 = vpop.f32.mrb[0].mxu0
    %v113 = vadd.f32 %v26, %v112
    %v114 = vpop.f32.mrb[0].mxu0
    %115 = vmatprep.mubr.f32.mxu0 0.0
    %116 = vmatmul.mubr.f32.gmra.mrb[0].mxu0 %v36
    %v117 = vpop.f32.mrb[0].mxu0
    %v118 = vadd.f32 %v26, %v117
    %v119 = vpop.f32.mrb[0].mxu0
    %120 = vmatprep.mubr.f32.mxu0 0.0
    %121 = vmatmul.mubr.f32.gmra.mrb[0].mxu0 %v39
    %v122 = vpop.f32.mrb[0].mxu0
    %v123 = vadd.f32 %v26, %v122
    %v124 = vpop.f32.mrb[0].mxu0
    %125 = vdwg.mxu0
    %vm126 = vcmask 261120
    %127 = vst.msk [vmem:[#allocation2] sm:$0xff] %vm126, %v108
    %128 = vst.msk [vmem:[#allocation2 + $0x8] sm:$0xff] %vm126, %v113
    %129 = vst.msk [vmem:[#allocation2 + $0x10] sm:$0xff] %vm126, %v118
    %130 = vst.msk [vmem:[#allocation2 + $0x18] sm:$0xff] %vm126, %v123
    // Predicated region
    $region14: #{tpu_custom_call.1} parent=1 // pred_check
      _
    $region15: #{tpu_custom_call.1} parent=1 // pred_check_branch
      %132 = sbr.rel (0) target = $region17
    $region16: #{tpu_custom_call.1} parent=1 // pred_region
      %s134 = ssub.s32 512, 512
      %135 = vsyncadd [#allocation3], %s134
      %s136 = sshll.u32 [#allocation2], 4
      %s137 = int_to_ptr.vmem [resolvable:$true] %s136
      %142 = dma.vmem_to_hbm [thread:$0]  %s137, 512, %s3, [#allocation3], 128, 128, 8
    $region17: #{tpu_custom_call.1} parent=1 // pred_fallthru
      _
    // Predicated region
    $region18: #{tpu_custom_call.1} parent=1 // pred_check
      _
    $region19: #{tpu_custom_call.1} parent=1 // pred_check_branch
      %144 = sbr.rel (0) target = $region21
    $region20: #{tpu_custom_call.1} parent=1 // pred_region
      %145 = dma.done [#allocation3], 512
    $region21: #{tpu_custom_call.1} parent=1 // pred_fallthru
      _
    %146 = vsyncpa [#allocation3], 1

</llo_original>
